<compile_context>
chip_gen: v6e
topology: v6e:2x2x1
jax: 0.10.0
libtpu: 0.0.40
codegen_flags: <defaults>
</compile_context>

<pallas_src>
import functools

import jax
import jax.numpy as jnp
from jax.experimental import pallas as pl
from jax.experimental.pallas import tpu as pltpu

_LANE = 128
_SUBLANE = 8
_SMALL_BYTES = 6 * 1024 * 1024          # single-block cutoff (in+out ~12 MiB VMEM)
_TARGET_BLOCK_BYTES = 4 * 1024 * 1024   # large-path per-input-block footprint
_VMEM_LIMIT_BYTES = 48 << 20            # OK on v5e/v6e (128 MiB) and v7x (64 MiB)


@functools.lru_cache(maxsize=None)
def _halfprec_native_ok() -> bool:
    """True when the VPU/EUP handle bf16/f16 natively (v6e / v7x and newer)."""
    try:
        kind = jax.devices()[0].device_kind.lower()
    except Exception:  # pragma: no cover - defensive
        return False
    return not any(tag in kind for tag in ("v2", "v3", "v4", "v5"))


def _compute_dtype(dtype):
    d = jnp.dtype(dtype)
    if d == jnp.dtype(jnp.float32):
        return jnp.float32
    if d in (jnp.dtype(jnp.bfloat16), jnp.dtype(jnp.float16)) and _halfprec_native_ok():
        return d            # skip the f32 round-trip on bf16-capable VPUs
    return jnp.float32


def _sigmoid_kernel(x_ref, o_ref, *, compute_dtype):
    x = x_ref[...].astype(compute_dtype)
    # Divide-free sigmoid: one EUP tanh + one VPU fma.  No f32 divide on the
    # VALU slot, so the kernel stays cleanly HBM-roofline-bound on v7x too.
    y = 0.5 * (jnp.tanh(0.5 * x) + 1.0)
    o_ref[...] = y.astype(o_ref.dtype)


def _round_up(v, m):
    return ((v + m - 1) // m) * m


def _pallas_sigmoid_impl(textures: jax.Array) -> jax.Array:
    """Elementwise sigmoid over an arbitrarily-shaped tensor via Pallas."""
    orig_shape = textures.shape
    dtype = textures.dtype
    n = textures.size
    if n == 0:
        return textures

    kernel = functools.partial(_sigmoid_kernel, compute_dtype=_compute_dtype(dtype))
    elem_bytes = jnp.dtype(dtype).itemsize

    if n * elem_bytes <= _SMALL_BYTES:
        # ---- small path: ONE full-array block, no grid, no wrapper copies ----
        # Only leading dims are collapsed (layout-preserving, effectively free),
        # so there is no pad / slice / relayout around the kernel at all.
        if textures.ndim >= 3:
            x = textures.reshape((-1,) + orig_shape[-2:])
        elif textures.ndim == 2:
            x = textures
        else:
            x = textures.reshape(1, -1)
        out = pl.pallas_call(
            kernel,
            out_shape=jax.ShapeDtypeStruct(x.shape, dtype),
        )(x)
        return out.reshape(orig_shape)

    # ---- large path: lane-dense (block_rows, 128) streaming blocks ----
    flat = textures.reshape(-1)
    rem = n % _LANE
    if rem:
        # Rare ragged tail (<=127 elements); common texture sizes hit rem == 0
        # and skip this copy entirely.  The partial last ROW-BLOCK (rows not a
        # multiple of block_rows) is masked by Pallas, never padded.
        flat = jnp.pad(flat, (0, _LANE - rem))
    rows = flat.size // _LANE
    x2d = flat.reshape(rows, _LANE)

    # ~4 MiB per input block => ~16 MiB double-buffered in+out, under the
    # raised scoped-VMEM limit on every generation.
    block_rows = _round_up(
        max(_SUBLANE, _TARGET_BLOCK_BYTES // (_LANE * elem_bytes)), _SUBLANE
    )
    # v7x has 2 TensorCores: keep the 'parallel' grid axis at >= 2 steps so
    # both cores get work even just above the small-path cutoff.
    if pl.cdiv(rows, block_rows) < 2 and rows > _SUBLANE:
        block_rows = max(_SUBLANE, _round_up(pl.cdiv(rows, 2), _SUBLANE))

    grid = (pl.cdiv(rows, block_rows),)   # partial last row-block is masked

    out2d = pl.pallas_call(
        kernel,
        out_shape=jax.ShapeDtypeStruct((rows, _LANE), dtype),
        grid_spec=pltpu.PrefetchScalarGridSpec(
            num_scalar_prefetch=0,
            grid=grid,
            in_specs=[pl.BlockSpec((block_rows, _LANE), lambda i: (i, 0))],
            out_specs=pl.BlockSpec((block_rows, _LANE), lambda i: (i, 0)),
        ),
        compiler_params=pltpu.CompilerParams(
            dimension_semantics=("parallel",),
            vmem_limit_bytes=_VMEM_LIMIT_BYTES,
        ),
    )(x2d)

    out = out2d.reshape(-1)
    if rem:
        out = out[:n]
    return out.reshape(orig_shape)


pallas_sigmoid = jax.jit(_pallas_sigmoid_impl)


class Model:
    """JAX/Pallas equivalent of the SoftRas texture-optimization Model."""

    def __init__(self, textures: jax.Array):
        self.textures = textures  # learnable parameter (synthetic init here)

    def forward(self) -> jax.Array:
        return pallas_sigmoid(self.textures)


if __name__ == "__main__":
    # Deterministic synthetic "textures" parameter.
    # SoftRas textures are shaped (batch, num_faces, texture_res**2, 3).
    key = jax.random.PRNGKey(0)
    textures = jax.random.normal(key, (1, 64, 16, 3), dtype=jnp.float32)

    model = Model(textures)
    out = jax.block_until_ready(model.forward())

    # Sanity check against pure-JAX reference.
    ref = jax.nn.sigmoid(textures)
    assert out.shape == textures.shape and out.dtype == textures.dtype
    assert jnp.max(jnp.abs(out - ref)) < 1e-5

    print("KERNEL_OK")
</pallas_src>

<mosaic_0001>
module attributes {stable_mosaic.version = 11 : i64} {
  func.func @_sigmoid_kernel(%arg0: memref<64x16x3xf32, #tpu.memory_space<vmem>>, %arg1: memref<64x16x3xf32, #tpu.memory_space<vmem>>) attributes {dimension_semantics = [], scalar_prefetch = 0 : i64, scratch_operands = 0 : i64, tpu.core_type = #tpu.core_type<tc>} {
    %c0 = arith.constant 0 : index
    %c0_0 = arith.constant 0 : index
    %c0_1 = arith.constant 0 : index
    %0 = vector.load %arg0[%c0, %c0_0, %c0_1] : memref<64x16x3xf32, #tpu.memory_space<vmem>>, vector<64x16x3xf32>
    %cst = arith.constant 5.000000e-01 : f32
    %1 = vector.broadcast %cst : f32 to vector<64x16x3xf32>
    %2 = arith.mulf %1, %0 : vector<64x16x3xf32>
    %3 = math.tanh %2 : vector<64x16x3xf32>
    %cst_2 = arith.constant 1.000000e+00 : f32
    %4 = vector.broadcast %cst_2 : f32 to vector<64x16x3xf32>
    %5 = arith.addf %3, %4 : vector<64x16x3xf32>
    %cst_3 = arith.constant 5.000000e-01 : f32
    %6 = vector.broadcast %cst_3 : f32 to vector<64x16x3xf32>
    %7 = arith.mulf %6, %5 : vector<64x16x3xf32>
    %c0_4 = arith.constant 0 : index
    %c0_5 = arith.constant 0 : index
    %c0_6 = arith.constant 0 : index
    %8 = vector.load %arg1[%c0_4, %c0_5, %c0_6] : memref<64x16x3xf32, #tpu.memory_space<vmem>>, vector<64x16x3xf32>
    tpu.vector_store %arg1[%c0_4, %c0_5, %c0_6], %7 {strides = array<i32>} : memref<64x16x3xf32, #tpu.memory_space<vmem>>, vector<64x16x3xf32>,
    return
  }
}

</mosaic_0001>

<llo_original>
// kernel: _pallas_sigmoid_impl.1
$region0: #{_pallas_sigmoid_impl.1}
  #allocation0 [shape = 'u32[]', space=smem, size = 0x4, offset = 0x4, fixed_abs, tag = 'smem constant byte address 0x4 - core index']
  #allocation1 [shape = 'u32[144,128]{1,0:T(1,128)}', space=vmem, size = 0x12000, scoped, tag = 'internal scratch']
  %s0 = inlined_call_operand.vmem [shape: f32[64,16,3], index: 0, kind: input, shape index: {}]
  %s1 = inlined_call_operand.vmem [shape: f32[64,16,3], index: 1, kind: output, shape index: {}]
  %s2 = sld [smem:[#allocation0]]
  $region14: #{_pallas_sigmoid_impl.1} parent=0
    _
  %s4 = ssub.s32 1, %s2
  %s5 = scalar_select 0, %s4, %s2
  // Predicated region
  $region2: #{_pallas_sigmoid_impl.1} parent=0 // pred_check
    _
  $region3: #{_pallas_sigmoid_impl.1} parent=0 // pred_check_branch
    %7 = sbr.rel (0) target = $region5
  $region4: #{_pallas_sigmoid_impl.1} parent=0 // pred_region
    _
  $region5: #{_pallas_sigmoid_impl.1} parent=0 // pred_fallthru
    _
  %v8 = vld [vmem:[%s0] sm:$0xff]
  %v9 = vld [vmem:[%s0 + $0x8] sm:$0xff]
  %v10 = vld [vmem:[%s0 + $0x10] sm:$0xff]
  %v11 = vld [vmem:[%s0 + $0x18] sm:$0xff]
  %v12 = vld [vmem:[%s0 + $0x20] sm:$0xff]
  %v13 = vld [vmem:[%s0 + $0x28] sm:$0xff]
  %v14 = vld [vmem:[%s0 + $0x30] sm:$0xff]
  %v15 = vld [vmem:[%s0 + $0x38] sm:$0xff]
  %v16 = vld [vmem:[%s0 + $0x40] sm:$0xff]
  %v17 = vld [vmem:[%s0 + $0x48] sm:$0xff]
  %v18 = vld [vmem:[%s0 + $0x50] sm:$0xff]
  %v19 = vld [vmem:[%s0 + $0x58] sm:$0xff]
  %v20 = vld [vmem:[%s0 + $0x60] sm:$0xff]
  %v21 = vld [vmem:[%s0 + $0x68] sm:$0xff]
  %v22 = vld [vmem:[%s0 + $0x70] sm:$0xff]
  %v23 = vld [vmem:[%s0 + $0x78] sm:$0xff]
  %v24 = vld [vmem:[%s0 + $0x80] sm:$0xff]
  %v25 = vld [vmem:[%s0 + $0x88] sm:$0xff]
  %v26 = vld [vmem:[%s0 + $0x90] sm:$0xff]
  %v27 = vld [vmem:[%s0 + $0x98] sm:$0xff]
  %v28 = vld [vmem:[%s0 + $0xa0] sm:$0xff]
  %v29 = vld [vmem:[%s0 + $0xa8] sm:$0xff]
  %v30 = vld [vmem:[%s0 + $0xb0] sm:$0xff]
  %v31 = vld [vmem:[%s0 + $0xb8] sm:$0xff]
  %v32 = vld [vmem:[%s0 + $0xc0] sm:$0xff]
  %v33 = vld [vmem:[%s0 + $0xc8] sm:$0xff]
  %v34 = vld [vmem:[%s0 + $0xd0] sm:$0xff]
  %v35 = vld [vmem:[%s0 + $0xd8] sm:$0xff]
  %v36 = vld [vmem:[%s0 + $0xe0] sm:$0xff]
  %v37 = vld [vmem:[%s0 + $0xe8] sm:$0xff]
  %v38 = vld [vmem:[%s0 + $0xf0] sm:$0xff]
  %v39 = vld [vmem:[%s0 + $0xf8] sm:$0xff]
  %v40 = vld [vmem:[%s0 + $0x100] sm:$0xff]
  %v41 = vld [vmem:[%s0 + $0x108] sm:$0xff]
  %v42 = vld [vmem:[%s0 + $0x110] sm:$0xff]
  %v43 = vld [vmem:[%s0 + $0x118] sm:$0xff]
  %v44 = vld [vmem:[%s0 + $0x120] sm:$0xff]
  %v45 = vld [vmem:[%s0 + $0x128] sm:$0xff]
  %v46 = vld [vmem:[%s0 + $0x130] sm:$0xff]
  %v47 = vld [vmem:[%s0 + $0x138] sm:$0xff]
  %v48 = vld [vmem:[%s0 + $0x140] sm:$0xff]
  %v49 = vld [vmem:[%s0 + $0x148] sm:$0xff]
  %v50 = vld [vmem:[%s0 + $0x150] sm:$0xff]
  %v51 = vld [vmem:[%s0 + $0x158] sm:$0xff]
  %v52 = vld [vmem:[%s0 + $0x160] sm:$0xff]
  %v53 = vld [vmem:[%s0 + $0x168] sm:$0xff]
  %v54 = vld [vmem:[%s0 + $0x170] sm:$0xff]
  %v55 = vld [vmem:[%s0 + $0x178] sm:$0xff]
  %v56 = vld [vmem:[%s0 + $0x180] sm:$0xff]
  %v57 = vld [vmem:[%s0 + $0x188] sm:$0xff]
  %v58 = vld [vmem:[%s0 + $0x190] sm:$0xff]
  %v59 = vld [vmem:[%s0 + $0x198] sm:$0xff]
  %v60 = vld [vmem:[%s0 + $0x1a0] sm:$0xff]
  %v61 = vld [vmem:[%s0 + $0x1a8] sm:$0xff]
  %v62 = vld [vmem:[%s0 + $0x1b0] sm:$0xff]
  %v63 = vld [vmem:[%s0 + $0x1b8] sm:$0xff]
  %v64 = vld [vmem:[%s0 + $0x1c0] sm:$0xff]
  %v65 = vld [vmem:[%s0 + $0x1c8] sm:$0xff]
  %v66 = vld [vmem:[%s0 + $0x1d0] sm:$0xff]
  %v67 = vld [vmem:[%s0 + $0x1d8] sm:$0xff]
  %v68 = vld [vmem:[%s0 + $0x1e0] sm:$0xff]
  %v69 = vld [vmem:[%s0 + $0x1e8] sm:$0xff]
  %v70 = vld [vmem:[%s0 + $0x1f0] sm:$0xff]
  %v71 = vld [vmem:[%s0 + $0x1f8] sm:$0xff]
  %v72 = vld [vmem:[%s0 + $0x200] sm:$0xff]
  %v73 = vld [vmem:[%s0 + $0x208] sm:$0xff]
  %v74 = vld [vmem:[%s0 + $0x210] sm:$0xff]
  %v75 = vld [vmem:[%s0 + $0x218] sm:$0xff]
  %v76 = vld [vmem:[%s0 + $0x220] sm:$0xff]
  %v77 = vld [vmem:[%s0 + $0x228] sm:$0xff]
  %v78 = vld [vmem:[%s0 + $0x230] sm:$0xff]
  %v79 = vld [vmem:[%s0 + $0x238] sm:$0xff]
  %v80 = vld [vmem:[%s0 + $0x240] sm:$0xff]
  %v81 = vld [vmem:[%s0 + $0x248] sm:$0xff]
  %v82 = vld [vmem:[%s0 + $0x250] sm:$0xff]
  %v83 = vld [vmem:[%s0 + $0x258] sm:$0xff]
  %v84 = vld [vmem:[%s0 + $0x260] sm:$0xff]
  %v85 = vld [vmem:[%s0 + $0x268] sm:$0xff]
  %v86 = vld [vmem:[%s0 + $0x270] sm:$0xff]
  %v87 = vld [vmem:[%s0 + $0x278] sm:$0xff]
  %v88 = vld [vmem:[%s0 + $0x280] sm:$0xff]
  %v89 = vld [vmem:[%s0 + $0x288] sm:$0xff]
  %v90 = vld [vmem:[%s0 + $0x290] sm:$0xff]
  %v91 = vld [vmem:[%s0 + $0x298] sm:$0xff]
  %v92 = vld [vmem:[%s0 + $0x2a0] sm:$0xff]
  %v93 = vld [vmem:[%s0 + $0x2a8] sm:$0xff]
  %v94 = vld [vmem:[%s0 + $0x2b0] sm:$0xff]
  %v95 = vld [vmem:[%s0 + $0x2b8] sm:$0xff]
  %v96 = vld [vmem:[%s0 + $0x2c0] sm:$0xff]
  %v97 = vld [vmem:[%s0 + $0x2c8] sm:$0xff]
  %v98 = vld [vmem:[%s0 + $0x2d0] sm:$0xff]
  %v99 = vld [vmem:[%s0 + $0x2d8] sm:$0xff]
  %v100 = vld [vmem:[%s0 + $0x2e0] sm:$0xff]
  %v101 = vld [vmem:[%s0 + $0x2e8] sm:$0xff]
  %v102 = vld [vmem:[%s0 + $0x2f0] sm:$0xff]
  %v103 = vld [vmem:[%s0 + $0x2f8] sm:$0xff]
  %v104 = vld [vmem:[%s0 + $0x300] sm:$0xff]
  %v105 = vld [vmem:[%s0 + $0x308] sm:$0xff]
  %v106 = vld [vmem:[%s0 + $0x310] sm:$0xff]
  %v107 = vld [vmem:[%s0 + $0x318] sm:$0xff]
  %v108 = vld [vmem:[%s0 + $0x320] sm:$0xff]
  %v109 = vld [vmem:[%s0 + $0x328] sm:$0xff]
  %v110 = vld [vmem:[%s0 + $0x330] sm:$0xff]
  %v111 = vld [vmem:[%s0 + $0x338] sm:$0xff]
  %v112 = vld [vmem:[%s0 + $0x340] sm:$0xff]
  %v113 = vld [vmem:[%s0 + $0x348] sm:$0xff]
  %v114 = vld [vmem:[%s0 + $0x350] sm:$0xff]
  %v115 = vld [vmem:[%s0 + $0x358] sm:$0xff]
  %v116 = vld [vmem:[%s0 + $0x360] sm:$0xff]
  %v117 = vld [vmem:[%s0 + $0x368] sm:$0xff]
  %v118 = vld [vmem:[%s0 + $0x370] sm:$0xff]
  %v119 = vld [vmem:[%s0 + $0x378] sm:$0xff]
  %v120 = vld [vmem:[%s0 + $0x380] sm:$0xff]
  %v121 = vld [vmem:[%s0 + $0x388] sm:$0xff]
  %v122 = vld [vmem:[%s0 + $0x390] sm:$0xff]
  %v123 = vld [vmem:[%s0 + $0x398] sm:$0xff]
  %v124 = vld [vmem:[%s0 + $0x3a0] sm:$0xff]
  %v125 = vld [vmem:[%s0 + $0x3a8] sm:$0xff]
  %v126 = vld [vmem:[%s0 + $0x3b0] sm:$0xff]
  %v127 = vld [vmem:[%s0 + $0x3b8] sm:$0xff]
  %v128 = vld [vmem:[%s0 + $0x3c0] sm:$0xff]
  %v129 = vld [vmem:[%s0 + $0x3c8] sm:$0xff]
  %v130 = vld [vmem:[%s0 + $0x3d0] sm:$0xff]
  %v131 = vld [vmem:[%s0 + $0x3d8] sm:$0xff]
  %v132 = vld [vmem:[%s0 + $0x3e0] sm:$0xff]
  %v133 = vld [vmem:[%s0 + $0x3e8] sm:$0xff]
  %v134 = vld [vmem:[%s0 + $0x3f0] sm:$0xff]
  %v135 = vld [vmem:[%s0 + $0x3f8] sm:$0xff]
  %v136 = vmul.f32 %v8, 0.5
  %v137 = vmul.f32 %v9, 0.5
  %v138 = vmul.f32 %v10, 0.5
  %v139 = vmul.f32 %v11, 0.5
  %v140 = vmul.f32 %v12, 0.5
  %v141 = vmul.f32 %v13, 0.5
  %v142 = vmul.f32 %v14, 0.5
  %v143 = vmul.f32 %v15, 0.5
  %v144 = vmul.f32 %v16, 0.5
  %v145 = vmul.f32 %v17, 0.5
  %v146 = vmul.f32 %v18, 0.5
  %v147 = vmul.f32 %v19, 0.5
  %v148 = vmul.f32 %v20, 0.5
  %v149 = vmul.f32 %v21, 0.5
  %v150 = vmul.f32 %v22, 0.5
  %v151 = vmul.f32 %v23, 0.5
  %v152 = vmul.f32 %v24, 0.5
  %v153 = vmul.f32 %v25, 0.5
  %v154 = vmul.f32 %v26, 0.5
  %v155 = vmul.f32 %v27, 0.5
  %v156 = vmul.f32 %v28, 0.5
  %v157 = vmul.f32 %v29, 0.5
  %v158 = vmul.f32 %v30, 0.5
  %v159 = vmul.f32 %v31, 0.5
  %v160 = vmul.f32 %v32, 0.5
  %v161 = vmul.f32 %v33, 0.5
  %v162 = vmul.f32 %v34, 0.5
  %v163 = vmul.f32 %v35, 0.5
  %v164 = vmul.f32 %v36, 0.5
  %v165 = vmul.f32 %v37, 0.5
  %v166 = vmul.f32 %v38, 0.5
  %v167 = vmul.f32 %v39, 0.5
  %v168 = vmul.f32 %v40, 0.5
  %v169 = vmul.f32 %v41, 0.5
  %v170 = vmul.f32 %v42, 0.5
  %v171 = vmul.f32 %v43, 0.5
  %v172 = vmul.f32 %v44, 0.5
  %v173 = vmul.f32 %v45, 0.5
  %v174 = vmul.f32 %v46, 0.5
  %v175 = vmul.f32 %v47, 0.5
  %v176 = vmul.f32 %v48, 0.5
  %v177 = vmul.f32 %v49, 0.5
  %v178 = vmul.f32 %v50, 0.5
  %v179 = vmul.f32 %v51, 0.5
  %v180 = vmul.f32 %v52, 0.5
  %v181 = vmul.f32 %v53, 0.5
  %v182 = vmul.f32 %v54, 0.5
  %v183 = vmul.f32 %v55, 0.5
  %v184 = vmul.f32 %v56, 0.5
  %v185 = vmul.f32 %v57, 0.5
  %v186 = vmul.f32 %v58, 0.5
  %v187 = vmul.f32 %v59, 0.5
  %v188 = vmul.f32 %v60, 0.5
  %v189 = vmul.f32 %v61, 0.5
  %v190 = vmul.f32 %v62, 0.5
  %v191 = vmul.f32 %v63, 0.5
  %v192 = vmul.f32 %v64, 0.5
  %v193 = vmul.f32 %v65, 0.5
  %v194 = vmul.f32 %v66, 0.5
  %v195 = vmul.f32 %v67, 0.5
  %v196 = vmul.f32 %v68, 0.5
  %v197 = vmul.f32 %v69, 0.5
  %v198 = vmul.f32 %v70, 0.5
  %v199 = vmul.f32 %v71, 0.5
  %v200 = vmul.f32 %v72, 0.5
  %v201 = vmul.f32 %v73, 0.5
  %v202 = vmul.f32 %v74, 0.5
  %v203 = vmul.f32 %v75, 0.5
  %v204 = vmul.f32 %v76, 0.5
  %v205 = vmul.f32 %v77, 0.5
  %v206 = vmul.f32 %v78, 0.5
  %v207 = vmul.f32 %v79, 0.5
  %v208 = vmul.f32 %v80, 0.5
  %v209 = vmul.f32 %v81, 0.5
  %v210 = vmul.f32 %v82, 0.5
  %v211 = vmul.f32 %v83, 0.5
  %v212 = vmul.f32 %v84, 0.5
  %v213 = vmul.f32 %v85, 0.5
  %v214 = vmul.f32 %v86, 0.5
  %v215 = vmul.f32 %v87, 0.5
  %v216 = vmul.f32 %v88, 0.5
  %v217 = vmul.f32 %v89, 0.5
  %v218 = vmul.f32 %v90, 0.5
  %v219 = vmul.f32 %v91, 0.5
  %v220 = vmul.f32 %v92, 0.5
  %v221 = vmul.f32 %v93, 0.5
  %v222 = vmul.f32 %v94, 0.5
  %v223 = vmul.f32 %v95, 0.5
  %v224 = vmul.f32 %v96, 0.5
  %v225 = vmul.f32 %v97, 0.5
  %v226 = vmul.f32 %v98, 0.5
  %v227 = vmul.f32 %v99, 0.5
  %v228 = vmul.f32 %v100, 0.5
  %v229 = vmul.f32 %v101, 0.5
  %v230 = vmul.f32 %v102, 0.5
  %v231 = vmul.f32 %v103, 0.5
  %v232 = vmul.f32 %v104, 0.5
  %v233 = vmul.f32 %v105, 0.5
  %v234 = vmul.f32 %v106, 0.5
  %v235 = vmul.f32 %v107, 0.5
  %v236 = vmul.f32 %v108, 0.5
  %v237 = vmul.f32 %v109, 0.5
  %v238 = vmul.f32 %v110, 0.5
  %v239 = vmul.f32 %v111, 0.5
  %v240 = vmul.f32 %v112, 0.5
  %v241 = vmul.f32 %v113, 0.5
  %v242 = vmul.f32 %v114, 0.5
  %v243 = vmul.f32 %v115, 0.5
  %v244 = vmul.f32 %v116, 0.5
  %v245 = vmul.f32 %v117, 0.5
  %v246 = vmul.f32 %v118, 0.5
  %v247 = vmul.f32 %v119, 0.5
  %v248 = vmul.f32 %v120, 0.5
  %v249 = vmul.f32 %v121, 0.5
  %v250 = vmul.f32 %v122, 0.5
  %v251 = vmul.f32 %v123, 0.5
  %v252 = vmul.f32 %v124, 0.5
  %v253 = vmul.f32 %v125, 0.5
  %v254 = vmul.f32 %v126, 0.5
  %v255 = vmul.f32 %v127, 0.5
  %v256 = vmul.f32 %v128, 0.5
  %v257 = vmul.f32 %v129, 0.5
  %v258 = vmul.f32 %v130, 0.5
  %v259 = vmul.f32 %v131, 0.5
  %v260 = vmul.f32 %v132, 0.5
  %v261 = vmul.f32 %v133, 0.5
  %v262 = vmul.f32 %v134, 0.5
  %v263 = vmul.f32 %v135, 0.5
  %v264 = vtanh.pop %v136
  %v265 = vtanh.pop %v137
  %v266 = vtanh.pop %v138
  %v267 = vtanh.pop %v139
  %v268 = vtanh.pop %v140
  %v269 = vtanh.pop %v141
  %v270 = vtanh.pop %v142
  %v271 = vtanh.pop %v143
  %v272 = vtanh.pop %v144
  %v273 = vtanh.pop %v145
  %v274 = vtanh.pop %v146
  %v275 = vtanh.pop %v147
  %v276 = vtanh.pop %v148
  %v277 = vtanh.pop %v149
  %v278 = vtanh.pop %v150
  %v279 = vtanh.pop %v151
  %v280 = vtanh.pop %v152
  %v281 = vtanh.pop %v153
  %v282 = vtanh.pop %v154
  %v283 = vtanh.pop %v155
  %v284 = vtanh.pop %v156
  %v285 = vtanh.pop %v157
  %v286 = vtanh.pop %v158
  %v287 = vtanh.pop %v159
  %v288 = vtanh.pop %v160
  %v289 = vtanh.pop %v161
  %v290 = vtanh.pop %v162
  %v291 = vtanh.pop %v163
  %v292 = vtanh.pop %v164
  %v293 = vtanh.pop %v165
  %v294 = vtanh.pop %v166
  %v295 = vtanh.pop %v167
  %v296 = vtanh.pop %v168
  %v297 = vtanh.pop %v169
  %v298 = vtanh.pop %v170
  %v299 = vtanh.pop %v171
  %v300 = vtanh.pop %v172
  %v301 = vtanh.pop %v173
  %v302 = vtanh.pop %v174
  %v303 = vtanh.pop %v175
  %v304 = vtanh.pop %v176
  %v305 = vtanh.pop %v177
  %v306 = vtanh.pop %v178
  %v307 = vtanh.pop %v179
  %v308 = vtanh.pop %v180
  %v309 = vtanh.pop %v181
  %v310 = vtanh.pop %v182
  %v311 = vtanh.pop %v183
  %v312 = vtanh.pop %v184
  %v313 = vtanh.pop %v185
  %v314 = vtanh.pop %v186
  %v315 = vtanh.pop %v187
  %v316 = vtanh.pop %v188
  %v317 = vtanh.pop %v189
  %v318 = vtanh.pop %v190
  %v319 = vtanh.pop %v191
  %v320 = vtanh.pop %v192
  %v321 = vtanh.pop %v193
  %v322 = vtanh.pop %v194
  %v323 = vtanh.pop %v195
  %v324 = vtanh.pop %v196
  %v325 = vtanh.pop %v197
  %v326 = vtanh.pop %v198
  %v327 = vtanh.pop %v199
  %v328 = vtanh.pop %v200
  %v329 = vtanh.pop %v201
  %v330 = vtanh.pop %v202
  %v331 = vtanh.pop %v203
  %v332 = vtanh.pop %v204
  %v333 = vtanh.pop %v205
  %v334 = vtanh.pop %v206
  %v335 = vtanh.pop %v207
  %v336 = vtanh.pop %v208
  %v337 = vtanh.pop %v209
  %v338 = vtanh.pop %v210
  %v339 = vtanh.pop %v211
  %v340 = vtanh.pop %v212
  %v341 = vtanh.pop %v213
  %v342 = vtanh.pop %v214
  %v343 = vtanh.pop %v215
  %v344 = vtanh.pop %v216
  %v345 = vtanh.pop %v217
  %v346 = vtanh.pop %v218
  %v347 = vtanh.pop %v219
  %v348 = vtanh.pop %v220
  %v349 = vtanh.pop %v221
  %v350 = vtanh.pop %v222
  %v351 = vtanh.pop %v223
  %v352 = vtanh.pop %v224
  %v353 = vtanh.pop %v225
  %v354 = vtanh.pop %v226
  %v355 = vtanh.pop %v227
  %v356 = vtanh.pop %v228
  %v357 = vtanh.pop %v229
  %v358 = vtanh.pop %v230
  %v359 = vtanh.pop %v231
  %v360 = vtanh.pop %v232
  %v361 = vtanh.pop %v233
  %v362 = vtanh.pop %v234
  %v363 = vtanh.pop %v235
  %v364 = vtanh.pop %v236
  %v365 = vtanh.pop %v237
  %v366 = vtanh.pop %v238
  %v367 = vtanh.pop %v239
  %v368 = vtanh.pop %v240
  %v369 = vtanh.pop %v241
  %v370 = vtanh.pop %v242
  %v371 = vtanh.pop %v243
  %v372 = vtanh.pop %v244
  %v373 = vtanh.pop %v245
  %v374 = vtanh.pop %v246
  %v375 = vtanh.pop %v247
  %v376 = vtanh.pop %v248
  %v377 = vtanh.pop %v249
  %v378 = vtanh.pop %v250
  %v379 = vtanh.pop %v251
  %v380 = vtanh.pop %v252
  %v381 = vtanh.pop %v253
  %v382 = vtanh.pop %v254
  %v383 = vtanh.pop %v255
  %v384 = vtanh.pop %v256
  %v385 = vtanh.pop %v257
  %v386 = vtanh.pop %v258
  %v387 = vtanh.pop %v259
  %v388 = vtanh.pop %v260
  %v389 = vtanh.pop %v261
  %v390 = vtanh.pop %v262
  %v391 = vtanh.pop %v263
  %v392 = vadd.f32 %v264, 1.0
  %v393 = vadd.f32 %v265, 1.0
  %v394 = vadd.f32 %v266, 1.0
  %v395 = vadd.f32 %v267, 1.0
  %v396 = vadd.f32 %v268, 1.0
  %v397 = vadd.f32 %v269, 1.0
  %v398 = vadd.f32 %v270, 1.0
  %v399 = vadd.f32 %v271, 1.0
  %v400 = vadd.f32 %v272, 1.0
  %v401 = vadd.f32 %v273, 1.0
  %v402 = vadd.f32 %v274, 1.0
  %v403 = vadd.f32 %v275, 1.0
  %v404 = vadd.f32 %v276, 1.0
  %v405 = vadd.f32 %v277, 1.0
  %v406 = vadd.f32 %v278, 1.0
  %v407 = vadd.f32 %v279, 1.0
  %v408 = vadd.f32 %v280, 1.0
  %v409 = vadd.f32 %v281, 1.0
  %v410 = vadd.f32 %v282, 1.0
  %v411 = vadd.f32 %v283, 1.0
  %v412 = vadd.f32 %v284, 1.0
  %v413 = vadd.f32 %v285, 1.0
  %v414 = vadd.f32 %v286, 1.0
  %v415 = vadd.f32 %v287, 1.0
  %v416 = vadd.f32 %v288, 1.0
  %v417 = vadd.f32 %v289, 1.0
  %v418 = vadd.f32 %v290, 1.0
  %v419 = vadd.f32 %v291, 1.0
  %v420 = vadd.f32 %v292, 1.0
  %v421 = vadd.f32 %v293, 1.0
  %v422 = vadd.f32 %v294, 1.0
  %v423 = vadd.f32 %v295, 1.0
  %v424 = vadd.f32 %v296, 1.0
  %v425 = vadd.f32 %v297, 1.0
  %v426 = vadd.f32 %v298, 1.0
  %v427 = vadd.f32 %v299, 1.0
  %v428 = vadd.f32 %v300, 1.0
  %v429 = vadd.f32 %v301, 1.0
  %v430 = vadd.f32 %v302, 1.0
  %v431 = vadd.f32 %v303, 1.0
  %v432 = vadd.f32 %v304, 1.0
  %v433 = vadd.f32 %v305, 1.0
  %v434 = vadd.f32 %v306, 1.0
  %v435 = vadd.f32 %v307, 1.0
  %v436 = vadd.f32 %v308, 1.0
  %v437 = vadd.f32 %v309, 1.0
  %v438 = vadd.f32 %v310, 1.0
  %v439 = vadd.f32 %v311, 1.0
  %v440 = vadd.f32 %v312, 1.0
  %v441 = vadd.f32 %v313, 1.0
  %v442 = vadd.f32 %v314, 1.0
  %v443 = vadd.f32 %v315, 1.0
  %v444 = vadd.f32 %v316, 1.0
  %v445 = vadd.f32 %v317, 1.0
  %v446 = vadd.f32 %v318, 1.0
  %v447 = vadd.f32 %v319, 1.0
  %v448 = vadd.f32 %v320, 1.0
  %v449 = vadd.f32 %v321, 1.0
  %v450 = vadd.f32 %v322, 1.0
  %v451 = vadd.f32 %v323, 1.0
  %v452 = vadd.f32 %v324, 1.0
  %v453 = vadd.f32 %v325, 1.0
  %v454 = vadd.f32 %v326, 1.0
  %v455 = vadd.f32 %v327, 1.0
  %v456 = vadd.f32 %v328, 1.0
  %v457 = vadd.f32 %v329, 1.0
  %v458 = vadd.f32 %v330, 1.0
  %v459 = vadd.f32 %v331, 1.0
  %v460 = vadd.f32 %v332, 1.0
  %v461 = vadd.f32 %v333, 1.0
  %v462 = vadd.f32 %v334, 1.0
  %v463 = vadd.f32 %v335, 1.0
  %v464 = vadd.f32 %v336, 1.0
  %v465 = vadd.f32 %v337, 1.0
  %v466 = vadd.f32 %v338, 1.0
  %v467 = vadd.f32 %v339, 1.0
  %v468 = vadd.f32 %v340, 1.0
  %v469 = vadd.f32 %v341, 1.0
  %v470 = vadd.f32 %v342, 1.0
  %v471 = vadd.f32 %v343, 1.0
  %v472 = vadd.f32 %v344, 1.0
  %v473 = vadd.f32 %v345, 1.0
  %v474 = vadd.f32 %v346, 1.0
  %v475 = vadd.f32 %v347, 1.0
  %v476 = vadd.f32 %v348, 1.0
  %v477 = vadd.f32 %v349, 1.0
  %v478 = vadd.f32 %v350, 1.0
  %v479 = vadd.f32 %v351, 1.0
  %v480 = vadd.f32 %v352, 1.0
  %v481 = vadd.f32 %v353, 1.0
  %v482 = vadd.f32 %v354, 1.0
  %v483 = vadd.f32 %v355, 1.0
  %v484 = vadd.f32 %v356, 1.0
  %v485 = vadd.f32 %v357, 1.0
  %v486 = vadd.f32 %v358, 1.0
  %v487 = vadd.f32 %v359, 1.0
  %v488 = vadd.f32 %v360, 1.0
  %v489 = vadd.f32 %v361, 1.0
  %v490 = vadd.f32 %v362, 1.0
  %v491 = vadd.f32 %v363, 1.0
  %v492 = vadd.f32 %v364, 1.0
  %v493 = vadd.f32 %v365, 1.0
  %v494 = vadd.f32 %v366, 1.0
  %v495 = vadd.f32 %v367, 1.0
  %v496 = vadd.f32 %v368, 1.0
  %v497 = vadd.f32 %v369, 1.0
  %v498 = vadd.f32 %v370, 1.0
  %v499 = vadd.f32 %v371, 1.0
  %v500 = vadd.f32 %v372, 1.0
  %v501 = vadd.f32 %v373, 1.0
  %v502 = vadd.f32 %v374, 1.0
  %v503 = vadd.f32 %v375, 1.0
  %v504 = vadd.f32 %v376, 1.0
  %v505 = vadd.f32 %v377, 1.0
  %v506 = vadd.f32 %v378, 1.0
  %v507 = vadd.f32 %v379, 1.0
  %v508 = vadd.f32 %v380, 1.0
  %v509 = vadd.f32 %v381, 1.0
  %v510 = vadd.f32 %v382, 1.0
  %v511 = vadd.f32 %v383, 1.0
  %v512 = vadd.f32 %v384, 1.0
  %v513 = vadd.f32 %v385, 1.0
  %v514 = vadd.f32 %v386, 1.0
  %v515 = vadd.f32 %v387, 1.0
  %v516 = vadd.f32 %v388, 1.0
  %v517 = vadd.f32 %v389, 1.0
  %v518 = vadd.f32 %v390, 1.0
  %v519 = vadd.f32 %v391, 1.0
  %v520 = vmul.f32 %v392, 0.5
  %v521 = vmul.f32 %v393, 0.5
  %v522 = vmul.f32 %v394, 0.5
  %v523 = vmul.f32 %v395, 0.5
  %v524 = vmul.f32 %v396, 0.5
  %v525 = vmul.f32 %v397, 0.5
  %v526 = vmul.f32 %v398, 0.5
  %v527 = vmul.f32 %v399, 0.5
  %v528 = vmul.f32 %v400, 0.5
  %v529 = vmul.f32 %v401, 0.5
  %v530 = vmul.f32 %v402, 0.5
  %v531 = vmul.f32 %v403, 0.5
  %v532 = vmul.f32 %v404, 0.5
  %v533 = vmul.f32 %v405, 0.5
  %v534 = vmul.f32 %v406, 0.5
  %v535 = vmul.f32 %v407, 0.5
  %v536 = vmul.f32 %v408, 0.5
  %v537 = vmul.f32 %v409, 0.5
  %v538 = vmul.f32 %v410, 0.5
  %v539 = vmul.f32 %v411, 0.5
  %v540 = vmul.f32 %v412, 0.5
  %v541 = vmul.f32 %v413, 0.5
  %v542 = vmul.f32 %v414, 0.5
  %v543 = vmul.f32 %v415, 0.5
  %v544 = vmul.f32 %v416, 0.5
  %v545 = vmul.f32 %v417, 0.5
  %v546 = vmul.f32 %v418, 0.5
  %v547 = vmul.f32 %v419, 0.5
  %v548 = vmul.f32 %v420, 0.5
  %v549 = vmul.f32 %v421, 0.5
  %v550 = vmul.f32 %v422, 0.5
  %v551 = vmul.f32 %v423, 0.5
  %v552 = vmul.f32 %v424, 0.5
  %v553 = vmul.f32 %v425, 0.5
  %v554 = vmul.f32 %v426, 0.5
  %v555 = vmul.f32 %v427, 0.5
  %v556 = vmul.f32 %v428, 0.5
  %v557 = vmul.f32 %v429, 0.5
  %v558 = vmul.f32 %v430, 0.5
  %v559 = vmul.f32 %v431, 0.5
  %v560 = vmul.f32 %v432, 0.5
  %v561 = vmul.f32 %v433, 0.5
  %v562 = vmul.f32 %v434, 0.5
  %v563 = vmul.f32 %v435, 0.5
  %v564 = vmul.f32 %v436, 0.5
  %v565 = vmul.f32 %v437, 0.5
  %v566 = vmul.f32 %v438, 0.5
  %v567 = vmul.f32 %v439, 0.5
  %v568 = vmul.f32 %v440, 0.5
  %v569 = vmul.f32 %v441, 0.5
  %v570 = vmul.f32 %v442, 0.5
  %v571 = vmul.f32 %v443, 0.5
  %v572 = vmul.f32 %v444, 0.5
  %v573 = vmul.f32 %v445, 0.5
  %v574 = vmul.f32 %v446, 0.5
  %v575 = vmul.f32 %v447, 0.5
  %v576 = vmul.f32 %v448, 0.5
  %v577 = vmul.f32 %v449, 0.5
  %v578 = vmul.f32 %v450, 0.5
  %v579 = vmul.f32 %v451, 0.5
  %v580 = vmul.f32 %v452, 0.5
  %v581 = vmul.f32 %v453, 0.5
  %v582 = vmul.f32 %v454, 0.5
  %v583 = vmul.f32 %v455, 0.5
  %v584 = vmul.f32 %v456, 0.5
  %v585 = vmul.f32 %v457, 0.5
  %v586 = vmul.f32 %v458, 0.5
  %v587 = vmul.f32 %v459, 0.5
  %v588 = vmul.f32 %v460, 0.5
  %v589 = vmul.f32 %v461, 0.5
  %v590 = vmul.f32 %v462, 0.5
  %v591 = vmul.f32 %v463, 0.5
  %v592 = vmul.f32 %v464, 0.5
  %v593 = vmul.f32 %v465, 0.5
  %v594 = vmul.f32 %v466, 0.5
  %v595 = vmul.f32 %v467, 0.5
  %v596 = vmul.f32 %v468, 0.5
  %v597 = vmul.f32 %v469, 0.5
  %v598 = vmul.f32 %v470, 0.5
  %v599 = vmul.f32 %v471, 0.5
  %v600 = vmul.f32 %v472, 0.5
  %v601 = vmul.f32 %v473, 0.5
  %v602 = vmul.f32 %v474, 0.5
  %v603 = vmul.f32 %v475, 0.5
  %v604 = vmul.f32 %v476, 0.5
  %v605 = vmul.f32 %v477, 0.5
  %v606 = vmul.f32 %v478, 0.5
  %v607 = vmul.f32 %v479, 0.5
  %v608 = vmul.f32 %v480, 0.5
  %v609 = vmul.f32 %v481, 0.5
  %v610 = vmul.f32 %v482, 0.5
  %v611 = vmul.f32 %v483, 0.5
  %v612 = vmul.f32 %v484, 0.5
  %v613 = vmul.f32 %v485, 0.5
  %v614 = vmul.f32 %v486, 0.5
  %v615 = vmul.f32 %v487, 0.5
  %v616 = vmul.f32 %v488, 0.5
  %v617 = vmul.f32 %v489, 0.5
  %v618 = vmul.f32 %v490, 0.5
  %v619 = vmul.f32 %v491, 0.5
  %v620 = vmul.f32 %v492, 0.5
  %v621 = vmul.f32 %v493, 0.5
  %v622 = vmul.f32 %v494, 0.5
  %v623 = vmul.f32 %v495, 0.5
  %v624 = vmul.f32 %v496, 0.5
  %v625 = vmul.f32 %v497, 0.5
  %v626 = vmul.f32 %v498, 0.5
  %v627 = vmul.f32 %v499, 0.5
  %v628 = vmul.f32 %v500, 0.5
  %v629 = vmul.f32 %v501, 0.5
  %v630 = vmul.f32 %v502, 0.5
  %v631 = vmul.f32 %v503, 0.5
  %v632 = vmul.f32 %v504, 0.5
  %v633 = vmul.f32 %v505, 0.5
  %v634 = vmul.f32 %v506, 0.5
  %v635 = vmul.f32 %v507, 0.5
  %v636 = vmul.f32 %v508, 0.5
  %v637 = vmul.f32 %v509, 0.5
  %v638 = vmul.f32 %v510, 0.5
  %v639 = vmul.f32 %v511, 0.5
  %v640 = vmul.f32 %v512, 0.5
  %v641 = vmul.f32 %v513, 0.5
  %v642 = vmul.f32 %v514, 0.5
  %v643 = vmul.f32 %v515, 0.5
  %v644 = vmul.f32 %v516, 0.5
  %v645 = vmul.f32 %v517, 0.5
  %v646 = vmul.f32 %v518, 0.5
  %v647 = vmul.f32 %v519, 0.5
  %vm648 = vcmask 23552
  %649 = vst.msk [vmem:[%s1] sm:$0xff] %vm648, %v520
  %650 = vst.msk [vmem:[%s1 + $0x8] sm:$0xff] %vm648, %v521
  %651 = vst.msk [vmem:[%s1 + $0x10] sm:$0xff] %vm648, %v522
  %652 = vst.msk [vmem:[%s1 + $0x18] sm:$0xff] %vm648, %v523
  %653 = vst.msk [vmem:[%s1 + $0x20] sm:$0xff] %vm648, %v524
  %654 = vst.msk [vmem:[%s1 + $0x28] sm:$0xff] %vm648, %v525
  %655 = vst.msk [vmem:[%s1 + $0x30] sm:$0xff] %vm648, %v526
  %656 = vst.msk [vmem:[%s1 + $0x38] sm:$0xff] %vm648, %v527
  %657 = vst.msk [vmem:[%s1 + $0x40] sm:$0xff] %vm648, %v528
  %658 = vst.msk [vmem:[%s1 + $0x48] sm:$0xff] %vm648, %v529
  %659 = vst.msk [vmem:[%s1 + $0x50] sm:$0xff] %vm648, %v530
  %660 = vst.msk [vmem:[%s1 + $0x58] sm:$0xff] %vm648, %v531
  %661 = vst.msk [vmem:[%s1 + $0x60] sm:$0xff] %vm648, %v532
  %662 = vst.msk [vmem:[%s1 + $0x68] sm:$0xff] %vm648, %v533
  %663 = vst.msk [vmem:[%s1 + $0x70] sm:$0xff] %vm648, %v534
  %664 = vst.msk [vmem:[%s1 + $0x78] sm:$0xff] %vm648, %v535
  %665 = vst.msk [vmem:[%s1 + $0x80] sm:$0xff] %vm648, %v536
  %666 = vst.msk [vmem:[%s1 + $0x88] sm:$0xff] %vm648, %v537
  %667 = vst.msk [vmem:[%s1 + $0x90] sm:$0xff] %vm648, %v538
  %668 = vst.msk [vmem:[%s1 + $0x98] sm:$0xff] %vm648, %v539
  %669 = vst.msk [vmem:[%s1 + $0xa0] sm:$0xff] %vm648, %v540
  %670 = vst.msk [vmem:[%s1 + $0xa8] sm:$0xff] %vm648, %v541
  %671 = vst.msk [vmem:[%s1 + $0xb0] sm:$0xff] %vm648, %v542
  %672 = vst.msk [vmem:[%s1 + $0xb8] sm:$0xff] %vm648, %v543
  %673 = vst.msk [vmem:[%s1 + $0xc0] sm:$0xff] %vm648, %v544
  %674 = vst.msk [vmem:[%s1 + $0xc8] sm:$0xff] %vm648, %v545
  %675 = vst.msk [vmem:[%s1 + $0xd0] sm:$0xff] %vm648, %v546
  %676 = vst.msk [vmem:[%s1 + $0xd8] sm:$0xff] %vm648, %v547
  %677 = vst.msk [vmem:[%s1 + $0xe0] sm:$0xff] %vm648, %v548
  %678 = vst.msk [vmem:[%s1 + $0xe8] sm:$0xff] %vm648, %v549
  %679 = vst.msk [vmem:[%s1 + $0xf0] sm:$0xff] %vm648, %v550
  %680 = vst.msk [vmem:[%s1 + $0xf8] sm:$0xff] %vm648, %v551
  %681 = vst.msk [vmem:[%s1 + $0x100] sm:$0xff] %vm648, %v552
  %682 = vst.msk [vmem:[%s1 + $0x108] sm:$0xff] %vm648, %v553
  %683 = vst.msk [vmem:[%s1 + $0x110] sm:$0xff] %vm648, %v554
  %684 = vst.msk [vmem:[%s1 + $0x118] sm:$0xff] %vm648, %v555
  %685 = vst.msk [vmem:[%s1 + $0x120] sm:$0xff] %vm648, %v556
  %686 = vst.msk [vmem:[%s1 + $0x128] sm:$0xff] %vm648, %v557
  %687 = vst.msk [vmem:[%s1 + $0x130] sm:$0xff] %vm648, %v558
  %688 = vst.msk [vmem:[%s1 + $0x138] sm:$0xff] %vm648, %v559
  %689 = vst.msk [vmem:[%s1 + $0x140] sm:$0xff] %vm648, %v560
  %690 = vst.msk [vmem:[%s1 + $0x148] sm:$0xff] %vm648, %v561
  %691 = vst.msk [vmem:[%s1 + $0x150] sm:$0xff] %vm648, %v562
  %692 = vst.msk [vmem:[%s1 + $0x158] sm:$0xff] %vm648, %v563
  %693 = vst.msk [vmem:[%s1 + $0x160] sm:$0xff] %vm648, %v564
  %694 = vst.msk [vmem:[%s1 + $0x168] sm:$0xff] %vm648, %v565
  %695 = vst.msk [vmem:[%s1 + $0x170] sm:$0xff] %vm648, %v566
  %696 = vst.msk [vmem:[%s1 + $0x178] sm:$0xff] %vm648, %v567
  %697 = vst.msk [vmem:[%s1 + $0x180] sm:$0xff] %vm648, %v568
  %698 = vst.msk [vmem:[%s1 + $0x188] sm:$0xff] %vm648, %v569
  %699 = vst.msk [vmem:[%s1 + $0x190] sm:$0xff] %vm648, %v570
  %700 = vst.msk [vmem:[%s1 + $0x198] sm:$0xff] %vm648, %v571
  %701 = vst.msk [vmem:[%s1 + $0x1a0] sm:$0xff] %vm648, %v572
  %702 = vst.msk [vmem:[%s1 + $0x1a8] sm:$0xff] %vm648, %v573
  %703 = vst.msk [vmem:[%s1 + $0x1b0] sm:$0xff] %vm648, %v574
  %704 = vst.msk [vmem:[%s1 + $0x1b8] sm:$0xff] %vm648, %v575
  %705 = vst.msk [vmem:[%s1 + $0x1c0] sm:$0xff] %vm648, %v576
  %706 = vst.msk [vmem:[%s1 + $0x1c8] sm:$0xff] %vm648, %v577
  %707 = vst.msk [vmem:[%s1 + $0x1d0] sm:$0xff] %vm648, %v578
  %708 = vst.msk [vmem:[%s1 + $0x1d8] sm:$0xff] %vm648, %v579
  %709 = vst.msk [vmem:[%s1 + $0x1e0] sm:$0xff] %vm648, %v580
  %710 = vst.msk [vmem:[%s1 + $0x1e8] sm:$0xff] %vm648, %v581
  %711 = vst.msk [vmem:[%s1 + $0x1f0] sm:$0xff] %vm648, %v582
  %712 = vst.msk [vmem:[%s1 + $0x1f8] sm:$0xff] %vm648, %v583
  %713 = vst.msk [vmem:[%s1 + $0x200] sm:$0xff] %vm648, %v584
  %714 = vst.msk [vmem:[%s1 + $0x208] sm:$0xff] %vm648, %v585
  %715 = vst.msk [vmem:[%s1 + $0x210] sm:$0xff] %vm648, %v586
  %716 = vst.msk [vmem:[%s1 + $0x218] sm:$0xff] %vm648, %v587
  %717 = vst.msk [vmem:[%s1 + $0x220] sm:$0xff] %vm648, %v588
  %718 = vst.msk [vmem:[%s1 + $0x228] sm:$0xff] %vm648, %v589
  %719 = vst.msk [vmem:[%s1 + $0x230] sm:$0xff] %vm648, %v590
  %720 = vst.msk [vmem:[%s1 + $0x238] sm:$0xff] %vm648, %v591
  %721 = vst.msk [vmem:[%s1 + $0x240] sm:$0xff] %vm648, %v592
  %722 = vst.msk [vmem:[%s1 + $0x248] sm:$0xff] %vm648, %v593
  %723 = vst.msk [vmem:[%s1 + $0x250] sm:$0xff] %vm648, %v594
  %724 = vst.msk [vmem:[%s1 + $0x258] sm:$0xff] %vm648, %v595
  %725 = vst.msk [vmem:[%s1 + $0x260] sm:$0xff] %vm648, %v596
  %726 = vst.msk [vmem:[%s1 + $0x268] sm:$0xff] %vm648, %v597
  %727 = vst.msk [vmem:[%s1 + $0x270] sm:$0xff] %vm648, %v598
  %728 = vst.msk [vmem:[%s1 + $0x278] sm:$0xff] %vm648, %v599
  %729 = vst.msk [vmem:[%s1 + $0x280] sm:$0xff] %vm648, %v600
  %730 = vst.msk [vmem:[%s1 + $0x288] sm:$0xff] %vm648, %v601
  %731 = vst.msk [vmem:[%s1 + $0x290] sm:$0xff] %vm648, %v602
  %732 = vst.msk [vmem:[%s1 + $0x298] sm:$0xff] %vm648, %v603
  %733 = vst.msk [vmem:[%s1 + $0x2a0] sm:$0xff] %vm648, %v604
  %734 = vst.msk [vmem:[%s1 + $0x2a8] sm:$0xff] %vm648, %v605
  %735 = vst.msk [vmem:[%s1 + $0x2b0] sm:$0xff] %vm648, %v606
  %736 = vst.msk [vmem:[%s1 + $0x2b8] sm:$0xff] %vm648, %v607
  %737 = vst.msk [vmem:[%s1 + $0x2c0] sm:$0xff] %vm648, %v608
  %738 = vst.msk [vmem:[%s1 + $0x2c8] sm:$0xff] %vm648, %v609
  %739 = vst.msk [vmem:[%s1 + $0x2d0] sm:$0xff] %vm648, %v610
  %740 = vst.msk [vmem:[%s1 + $0x2d8] sm:$0xff] %vm648, %v611
  %741 = vst.msk [vmem:[%s1 + $0x2e0] sm:$0xff] %vm648, %v612
  %742 = vst.msk [vmem:[%s1 + $0x2e8] sm:$0xff] %vm648, %v613
  %743 = vst.msk [vmem:[%s1 + $0x2f0] sm:$0xff] %vm648, %v614
  %744 = vst.msk [vmem:[%s1 + $0x2f8] sm:$0xff] %vm648, %v615
  %745 = vst.msk [vmem:[%s1 + $0x300] sm:$0xff] %vm648, %v616
  %746 = vst.msk [vmem:[%s1 + $0x308] sm:$0xff] %vm648, %v617
  %747 = vst.msk [vmem:[%s1 + $0x310] sm:$0xff] %vm648, %v618
  %748 = vst.msk [vmem:[%s1 + $0x318] sm:$0xff] %vm648, %v619
  %749 = vst.msk [vmem:[%s1 + $0x320] sm:$0xff] %vm648, %v620
  %750 = vst.msk [vmem:[%s1 + $0x328] sm:$0xff] %vm648, %v621
  %751 = vst.msk [vmem:[%s1 + $0x330] sm:$0xff] %vm648, %v622
  %752 = vst.msk [vmem:[%s1 + $0x338] sm:$0xff] %vm648, %v623
  %753 = vst.msk [vmem:[%s1 + $0x340] sm:$0xff] %vm648, %v624
  %754 = vst.msk [vmem:[%s1 + $0x348] sm:$0xff] %vm648, %v625
  %755 = vst.msk [vmem:[%s1 + $0x350] sm:$0xff] %vm648, %v626
  %756 = vst.msk [vmem:[%s1 + $0x358] sm:$0xff] %vm648, %v627
  %757 = vst.msk [vmem:[%s1 + $0x360] sm:$0xff] %vm648, %v628
  %758 = vst.msk [vmem:[%s1 + $0x368] sm:$0xff] %vm648, %v629
  %759 = vst.msk [vmem:[%s1 + $0x370] sm:$0xff] %vm648, %v630
  %760 = vst.msk [vmem:[%s1 + $0x378] sm:$0xff] %vm648, %v631
  %761 = vst.msk [vmem:[%s1 + $0x380] sm:$0xff] %vm648, %v632
  %762 = vst.msk [vmem:[%s1 + $0x388] sm:$0xff] %vm648, %v633
  %763 = vst.msk [vmem:[%s1 + $0x390] sm:$0xff] %vm648, %v634
  %764 = vst.msk [vmem:[%s1 + $0x398] sm:$0xff] %vm648, %v635
  %765 = vst.msk [vmem:[%s1 + $0x3a0] sm:$0xff] %vm648, %v636
  %766 = vst.msk [vmem:[%s1 + $0x3a8] sm:$0xff] %vm648, %v637
  %767 = vst.msk [vmem:[%s1 + $0x3b0] sm:$0xff] %vm648, %v638
  %768 = vst.msk [vmem:[%s1 + $0x3b8] sm:$0xff] %vm648, %v639
  %769 = vst.msk [vmem:[%s1 + $0x3c0] sm:$0xff] %vm648, %v640
  %770 = vst.msk [vmem:[%s1 + $0x3c8] sm:$0xff] %vm648, %v641
  %771 = vst.msk [vmem:[%s1 + $0x3d0] sm:$0xff] %vm648, %v642
  %772 = vst.msk [vmem:[%s1 + $0x3d8] sm:$0xff] %vm648, %v643
  %773 = vst.msk [vmem:[%s1 + $0x3e0] sm:$0xff] %vm648, %v644
  %774 = vst.msk [vmem:[%s1 + $0x3e8] sm:$0xff] %vm648, %v645
  %775 = vst.msk [vmem:[%s1 + $0x3f0] sm:$0xff] %vm648, %v646
  %776 = vst.msk [vmem:[%s1 + $0x3f8] sm:$0xff] %vm648, %v647
  // Predicated region
  $region6: #{_pallas_sigmoid_impl.1} parent=0 // pred_check
    _
  $region7: #{_pallas_sigmoid_impl.1} parent=0 // pred_check_branch
    %778 = sbr.rel (0) target = $region9
  $region8: #{_pallas_sigmoid_impl.1} parent=0 // pred_region
    _
  $region9: #{_pallas_sigmoid_impl.1} parent=0 // pred_fallthru
    _
  // Predicated region
  $region10: #{_pallas_sigmoid_impl.1} parent=0 // pred_check
    _
  $region11: #{_pallas_sigmoid_impl.1} parent=0 // pred_check_branch
    %780 = sbr.rel (0) target = $region13
  $region12: #{_pallas_sigmoid_impl.1} parent=0 // pred_region
    _
  $region13: #{_pallas_sigmoid_impl.1} parent=0 // pred_fallthru
    _

</llo_original>
